<compile_context>
chip_gen: v5e
topology: v5e:2x2
jax: 0.10.0
libtpu: 0.0.40
codegen_flags: <defaults>
</compile_context>

<pallas_src>
import functools
import math

import jax
import jax.numpy as jnp
from jax.experimental import pallas as pl
from jax.experimental.pallas import tpu as pltpu

_LANES = 128      # vreg lane width
_SUBLANES = 8     # f32 sublane tile


def _round_up(n, m):
    return (n + m - 1) // m * m


def _dqn_kernel(x_ref, p_ref, q_ref, a_ref, *, n_in, k1, n_out, r_b1, r_w2, r_b2):
    f32 = jnp.float32
    mdt = p_ref.dtype                                   # matmul (MXU) dtype, bf16
    x = x_ref[...].astype(f32)                          # (TB, n_in)
    tb = x.shape[0]
    if n_in < k1:                                       # lane-pad x to an 8-aligned K (static)
        x = jnp.concatenate([x, jnp.zeros((tb, k1 - n_in), f32)], axis=-1)

    # Layer 1 on the MXU. Padded x lanes / padded W1 rows & cols are zero.
    h = jnp.dot(x.astype(mdt), p_ref[0:k1, :], preferred_element_type=f32)     # (TB, 128)
    h = jnp.tanh(h + p_ref[r_b1:r_b1 + 1, :].astype(f32))                      # f32 VPU + EUP

    # Layer 2 on the MXU over the full 128-lane padded hidden dim.
    lanes = h.shape[-1]
    q = jnp.dot(h.astype(mdt), p_ref[r_w2:r_w2 + lanes, :],
                preferred_element_type=f32)                                    # (TB, 128)
    q = q + p_ref[r_b2:r_b2 + 1, :].astype(f32)          # padded cols stay exactly 0

    # Store only the useful Q-values (no 64x-padded HBM writeback, no wrapper slice).
    q_ref[...] = q[:, 0:n_out].astype(q_ref.dtype)

    # Fused consumer: greedy action = first argmax over the n_out valid columns.
    col = jax.lax.broadcasted_iota(jnp.int32, q.shape, 1)
    qv = jnp.where(col < n_out, q, -jnp.inf)
    row_max = jnp.max(qv, axis=-1, keepdims=True)
    first_max = jnp.min(jnp.where(qv == row_max, col, lanes), axis=-1, keepdims=True)
    a_ref[...] = first_max.astype(jnp.int32)
    # TODO(synk): for full RL loops, also fuse epsilon-greedy sampling / TD targets here.


def pack_dqn_params(w1, b1, w2, b2, dtype=jnp.bfloat16):
    """Pack (in, out)-layout params into one lane-dense slab (done once at init).

    w1: (n_input, hidden); b1: (1, hidden) or (hidden,);
    w2: (hidden, n_output); b2: (1, n_output) or (n_output,).
    Hidden is zero-padded to 128 lanes / 128 K-rows so the kernel runs full-lane.
    Returns (slab, meta); slab is (rows, 128) in `dtype` (bf16 for MXU-native rate).
    """
    n_in, hidden = w1.shape
    n_out = w2.shape[1]
    lanes = _LANES
    assert n_in <= lanes and hidden <= lanes and n_out <= lanes
    k1 = _round_up(n_in, _SUBLANES)               # layer-1 contraction depth (>= n_in)
    r_b1 = k1                                      # b1 row
    r_w2 = _round_up(r_b1 + 1, _SUBLANES)          # W2 rows start (K2 = 128 rows)
    r_b2 = r_w2 + lanes                            # b2 row
    rows = _round_up(r_b2 + 1, _SUBLANES)
    slab = jnp.zeros((rows, lanes), jnp.float32)
    slab = slab.at[0:n_in, 0:hidden].set(w1.astype(jnp.float32))
    slab = slab.at[r_b1, 0:hidden].set(jnp.reshape(b1, (hidden,)).astype(jnp.float32))
    slab = slab.at[r_w2:r_w2 + hidden, 0:n_out].set(w2.astype(jnp.float32))
    slab = slab.at[r_b2, 0:n_out].set(jnp.reshape(b2, (n_out,)).astype(jnp.float32))
    slab = slab.astype(dtype)
    meta = dict(n_in=n_in, k1=k1, hidden=hidden, n_out=n_out,
                r_b1=r_b1, r_w2=r_w2, r_b2=r_b2, rows=rows, lanes=lanes)
    return slab, meta


def dqn_forward(x, slab, meta, *, block_b=512):
    """x: (B, n_input) f32; (slab, meta) from pack_dqn_params.

    Returns (q, action): q is (B, n_output) f32 Q-values (forward semantics of the
    PyTorch module); action is (B,) int32 fused greedy argmax over q.
    """
    B, n_in = x.shape
    assert n_in == meta["n_in"]
    TB = min(block_b, _round_up(B, _SUBLANES))     # batch tile (multiple of 8)
    B_pad = _round_up(B, TB)
    if B_pad != B:
        x = jnp.pad(x, ((0, B_pad - B), (0, 0)))
    grid = (B_pad // TB,)

    kernel = functools.partial(
        _dqn_kernel, n_in=n_in, k1=meta["k1"], n_out=meta["n_out"],
        r_b1=meta["r_b1"], r_w2=meta["r_w2"], r_b2=meta["r_b2"])

    q, act = pl.pallas_call(
        kernel,
        out_shape=(jax.ShapeDtypeStruct((B_pad, meta["n_out"]), x.dtype),
                   jax.ShapeDtypeStruct((B_pad, 1), jnp.int32)),
        grid=grid,
        in_specs=[
            pl.BlockSpec((TB, n_in), lambda i: (i, 0)),                    # batch tile of x
            pl.BlockSpec((meta["rows"], meta["lanes"]), lambda i: (0, 0)),  # resident params
        ],
        out_specs=(
            pl.BlockSpec((TB, meta["n_out"]), lambda i: (i, 0)),
            pl.BlockSpec((TB, 1), lambda i: (i, 0)),
        ),
        compiler_params=pltpu.CompilerParams(dimension_semantics=("parallel",)),
    )(x, slab)

    if B_pad != B:
        q, act = q[:B], act[:B]
    return q, act[:, 0]


def init_dqn_params(key, n_input, n_output, hidden=64, dtype=jnp.float32):
    """Deterministic init matching nn.Linear's U(-1/sqrt(fan_in), 1/sqrt(fan_in))."""
    k1, k2, k3, k4 = jax.random.split(key, 4)
    bound1 = 1.0 / math.sqrt(n_input)
    bound2 = 1.0 / math.sqrt(hidden)
    # Stored as (in, out): transpose of PyTorch's (out, in) weight layout.
    w1 = jax.random.uniform(k1, (n_input, hidden), dtype, -bound1, bound1)
    b1 = jax.random.uniform(k2, (1, hidden), dtype, -bound1, bound1)
    w2 = jax.random.uniform(k3, (hidden, n_output), dtype, -bound2, bound2)
    b2 = jax.random.uniform(k4, (1, n_output), dtype, -bound2, bound2)
    return w1, b1, w2, b2


if __name__ == "__main__":
    # CartPole dims: 4 observation features -> 2 actions. Batch 128 of replay
    # states, tiled TB=64 so the parallel batch grid axis is actually exercised.
    B, N_INPUT, N_OUTPUT = 128, 4, 2

    key = jax.random.PRNGKey(0)
    kx, kp = jax.random.split(key)
    x = jax.random.normal(kx, (B, N_INPUT), dtype=jnp.float32)
    w1, b1, w2, b2 = init_dqn_params(kp, N_INPUT, N_OUTPUT)
    slab, meta = pack_dqn_params(w1, b1, w2, b2)   # packed once at init (bf16)

    q, act = dqn_forward(x, slab, meta, block_b=64)   # grid=(2,), "parallel"
    q = jax.block_until_ready(q)
    act = jax.block_until_ready(act)

    # Pure-JAX f32 reference of the same math. Kernel matmuls use bf16 MXU
    # inputs with f32 accumulation, so compare at bf16-level tolerance.
    ref = jnp.tanh(x @ w1 + b1) @ w2 + b2
    assert q.shape == (B, N_OUTPUT) and act.shape == (B,)
    assert jnp.allclose(q, ref, atol=5e-2, rtol=5e-2)
    # Fused greedy action must match argmax over the kernel's own Q-values.
    assert jnp.array_equal(act, jnp.argmax(q, axis=-1).astype(jnp.int32))

    print("KERNEL_OK")
</pallas_src>

<mosaic_0001>
module attributes {stable_mosaic.version = 11 : i64} {
  func.func @_dqn_kernel(%arg0: i32, %arg1: memref<64x4xf32, #tpu.memory_space<vmem>>, %arg2: memref<152x128xbf16, #tpu.memory_space<vmem>>, %arg3: memref<64x2xf32, #tpu.memory_space<vmem>>, %arg4: memref<64x1xi32, #tpu.memory_space<vmem>>) attributes {dimension_semantics = [#tpu.dimension_semantics<parallel>], iteration_bounds = array<i64: 2>, scalar_prefetch = 0 : i64, scratch_operands = 0 : i64, tpu.core_type = #tpu.core_type<tc>, window_params = [{transform_indices = @transform_0, window_bounds = array<i64: 64, 4>}, {pipeline_mode = #tpu.pipeline_mode<synchronous>, transform_indices = @transform_1, window_bounds = array<i64: 152, 128>}, {transform_indices = @transform_2, window_bounds = array<i64: 64, 2>}, {transform_indices = @transform_3, window_bounds = array<i64: 64, 1>}]} {
    %c0 = arith.constant 0 : index
    %c0_0 = arith.constant 0 : index
    %0 = vector.load %arg1[%c0, %c0_0] : memref<64x4xf32, #tpu.memory_space<vmem>>, vector<64x4xf32>
    %cst = arith.constant 0.000000e+00 : f32
    %1 = vector.broadcast %cst : f32 to vector<64x4xf32>
    %2 = tpu.concatenate %0, %1 in 1 : vector<64x4xf32>, vector<64x4xf32> -> vector<64x8xf32>
    %3 = arith.truncf %2 : vector<64x8xf32> to vector<64x8xbf16>
    %c0_1 = arith.constant 0 : index
    %c0_2 = arith.constant 0 : index
    %4 = vector.load %arg2[%c0_1, %c0_2] : memref<152x128xbf16, #tpu.memory_space<vmem>>, vector<8x128xbf16>
    %cst_3 = arith.constant dense<0.000000e+00> : vector<64x128xf32>
    %5 = tpu.matmul %3, %4, %cst_3 {dimension_numbers = #tpu.dot_dimension_numbers<[1], [0], [0], [1], [0, 0, 1, 1], [], []>} : vector<64x8xbf16>, vector<8x128xbf16>, vector<64x128xf32> -> vector<64x128xf32>
    %c8 = arith.constant 8 : index
    %c0_4 = arith.constant 0 : index
    %6 = vector.load %arg2[%c8, %c0_4] : memref<152x128xbf16, #tpu.memory_space<vmem>>, vector<1x128xbf16>
    %7 = arith.extf %6 : vector<1x128xbf16> to vector<1x128xf32>
    %8 = vector.broadcast %7 : vector<1x128xf32> to vector<64x128xf32>
    %9 = arith.addf %5, %8 : vector<64x128xf32>
    %10 = math.tanh %9 : vector<64x128xf32>
    %11 = arith.truncf %10 : vector<64x128xf32> to vector<64x128xbf16>
    %c16 = arith.constant 16 : index
    %c0_5 = arith.constant 0 : index
    %12 = vector.load %arg2[%c16, %c0_5] : memref<152x128xbf16, #tpu.memory_space<vmem>>, vector<128x128xbf16>
    %cst_6 = arith.constant dense<0.000000e+00> : vector<64x128xf32>
    %13 = tpu.matmul %11, %12, %cst_6 {dimension_numbers = #tpu.dot_dimension_numbers<[1], [0], [0], [1], [0, 0, 1, 1], [], []>} : vector<64x128xbf16>, vector<128x128xbf16>, vector<64x128xf32> -> vector<64x128xf32>
    %c144 = arith.constant 144 : index
    %c0_7 = arith.constant 0 : index
    %14 = vector.load %arg2[%c144, %c0_7] : memref<152x128xbf16, #tpu.memory_space<vmem>>, vector<1x128xbf16>
    %15 = arith.extf %14 : vector<1x128xbf16> to vector<1x128xf32>
    %16 = vector.broadcast %15 : vector<1x128xf32> to vector<64x128xf32>
    %17 = arith.addf %13, %16 : vector<64x128xf32>
    %18 = vector.extract_strided_slice %17 {offsets = [0, 0], sizes = [64, 2], strides = [1, 1]} : vector<64x128xf32> to vector<64x2xf32>
    %c0_8 = arith.constant 0 : index
    %c0_9 = arith.constant 0 : index
    %19 = vector.load %arg3[%c0_8, %c0_9] : memref<64x2xf32, #tpu.memory_space<vmem>>, vector<64x2xf32>
    tpu.vector_store %arg3[%c0_8, %c0_9], %18 {strides = array<i32>} : memref<64x2xf32, #tpu.memory_space<vmem>>, vector<64x2xf32>,
    %20 = tpu.iota {dimensions = array<i32: 1>} : vector<64x128xi32>
    %c2_i32 = arith.constant 2 : i32
    %21 = vector.broadcast %c2_i32 : i32 to vector<64x128xi32>
    %22 = arith.cmpi slt, %20, %21 : vector<64x128xi32>
    %cst_10 = arith.constant 0xFF800000 : f32
    %23 = vector.broadcast %cst_10 : f32 to vector<64x128xf32>
    %24 = arith.select %22, %17, %23 : vector<64x128xi1>, vector<64x128xf32>
    %cst_11 = arith.constant dense<0xFF800000> : vector<64xf32>
    %25 = vector.multi_reduction <maximumf>, %24, %cst_11 [1] : vector<64x128xf32> to vector<64xf32>
    %26 = vector.shape_cast %25 : vector<64xf32> to vector<64x1xf32>
    %27 = vector.broadcast %26 : vector<64x1xf32> to vector<64x128xf32>
    %28 = arith.cmpf oeq, %24, %27 : vector<64x128xf32>
    %c128_i32 = arith.constant 128 : i32
    %29 = vector.broadcast %c128_i32 : i32 to vector<64x128xi32>
    %30 = arith.select %28, %20, %29 : vector<64x128xi1>, vector<64x128xi32>
    %cst_12 = arith.constant dense<2147483647> : vector<64xi32>
    %31 = vector.multi_reduction <minsi>, %30, %cst_12 [1] : vector<64x128xi32> to vector<64xi32>
    %32 = vector.shape_cast %31 : vector<64xi32> to vector<64x1xi32>
    %c0_13 = arith.constant 0 : index
    %c0_14 = arith.constant 0 : index
    %33 = vector.load %arg4[%c0_13, %c0_14] : memref<64x1xi32, #tpu.memory_space<vmem>>, vector<64x1xi32>
    tpu.vector_store %arg4[%c0_13, %c0_14], %32 {strides = array<i32>} : memref<64x1xi32, #tpu.memory_space<vmem>>, vector<64x1xi32>,
    return
  }
  func.func @transform_0(%arg0: i32) -> (i32, i32) {
    %c0_i32 = arith.constant 0 : i32
    %c0_i32_0 = arith.constant 0 : i32
    return %arg0, %c0_i32 : i32, i32
  }
  func.func @transform_1(%arg0: i32) -> (i32, i32) {
    %c0_i32 = arith.constant 0 : i32
    %c0_i32_0 = arith.constant 0 : i32
    %c0_i32_1 = arith.constant 0 : i32
    return %c0_i32, %c0_i32_0 : i32, i32
  }
  func.func @transform_2(%arg0: i32) -> (i32, i32) {
    %c0_i32 = arith.constant 0 : i32
    %c0_i32_0 = arith.constant 0 : i32
    return %arg0, %c0_i32 : i32, i32
  }
  func.func @transform_3(%arg0: i32) -> (i32, i32) {
    %c0_i32 = arith.constant 0 : i32
    %c0_i32_0 = arith.constant 0 : i32
    return %arg0, %c0_i32 : i32, i32
  }
}

</mosaic_0001>

<llo_original>
// kernel: tpu_custom_call.1
$region0: #{tpu_custom_call.1}
  #allocation0 [shape = 'u32[]', space=smem, size = 0x4, offset = 0x4, fixed_abs, tag = 'smem constant byte address 0x4 - core index']
  #allocation1 [shape = 'u32[72,128]{1,0:T(1,128)}', space=vmem, size = 0x9000, scoped, tag = 'internal scratch']
  %s0 = inlined_call_operand.vmem [shape: f32[128,4], index: 0, kind: input, shape index: {}]
  %s1 = inlined_call_operand.vmem [shape: bf16[152,128], index: 1, kind: input, shape index: {}]
  %s2 = inlined_call_operand.vmem [shape: f32[128,2], index: 2, kind: output, shape index: {0}]
  %s3 = inlined_call_operand.vmem [shape: s32[128,1], index: 3, kind: output, shape index: {1}]
  %4 = xla_tuple %s2, %s3
  %s5 = sld [smem:[#allocation0]]
  $region49: #{tpu_custom_call.1} parent=0
    _
  %s7 = ssub.s32 1, %s5
  %s8 = scalar_select 0, %s7, %s5
  loop: start=0, step=1, limit=4
  $region2: #{tpu_custom_call.1} parent=0 // loop_pre_header
    _
  $region3: #{tpu_custom_call.1} parent=0 // loop_header
    %s10 = sphi 0, %s14
    %p11 = scmp.ge.s32.totalorder %s10, 4
    %s20 = sphi 0, %s22
    %s23 = sphi 0, %s20
    %s24 = sphi 0, %s23
    %s40 = sphi 0, %s24
    %s44 = sphi 0, %s44
    %s46 = sphi 0, %s44
    %s47 = sphi 0, %s46
    %s61 = sphi 0, %s47
    %s67 = sphi 0, %s69
    %s70 = sphi 0, %s67
    %s71 = sphi 0, %s70
    %s87 = sphi 0, %s71
    %s93 = sphi 0, %s95
    %s96 = sphi 0, %s93
    %s97 = sphi 0, %s96
    %s113 = sphi 0, %s97
  $region4: #{tpu_custom_call.1} parent=0 // loop_header_branch
    %13 = sbr.rel (%p11) target = $region8
  $region5: #{tpu_custom_call.1} parent=0 // loop_body
    %s15 = ssub.s32 %s10, 1
    %s16 = ssub.s32 %s10, 2
    %s17 = sadd.s32 %s10, 1
    %s18 = ssub.s32 %s10, %s17
    %p19 = scmp.eq.s32.totalorder %s18, 0
    %s21 = sadd.s32 %s20, 1
    %s22 = scalar_select %p19, %s20, %s21
    %p25 = pneg %p19
    %p26 = scmp.eq.s32.totalorder %s10, 1
    %p27 = por %p25, %p26
    %p28 = scmp.ne.s32.totalorder %s20, %s23
    %p29 = scmp.eq.s32.totalorder %s10, 0
    %p30 = por %p28, %p29
    %p31 = scmp.ne.s32.totalorder %s20, %s23
    %p32 = scmp.eq.s32.totalorder %s15, 1
    %p33 = por %p31, %p32
    %p34 = scmp.ne.s32.totalorder %s23, %s24
    %p35 = scmp.eq.s32.totalorder %s15, 0
    %p36 = por %p34, %p35
    %p37 = scmp.ne.s32.totalorder %s23, %s24
    %p38 = scmp.eq.s32.totalorder %s16, 1
    %p39 = por %p37, %p38
    %p41 = scmp.ne.s32.totalorder %s24, %s40
    %p42 = scmp.eq.s32.totalorder %s16, 0
    %p43 = por %p41, %p42
    %s45 = sadd.s32 %s44, 1
    %p48 = scmp.eq.s32.totalorder %s10, 1
    %p49 = scmp.ne.s32.totalorder %s44, %s46
    %p50 = scmp.eq.s32.totalorder %s10, 0
    %p51 = por %p49, %p50
    %p52 = scmp.ne.s32.totalorder %s44, %s46
    %p53 = scmp.eq.s32.totalorder %s15, 1
    %p54 = por %p52, %p53
    %p55 = scmp.ne.s32.totalorder %s46, %s47
    %p56 = scmp.eq.s32.totalorder %s15, 0
    %p57 = por %p55, %p56
    %p58 = scmp.ne.s32.totalorder %s46, %s47
    %p59 = scmp.eq.s32.totalorder %s16, 1
    %p60 = por %p58, %p59
    %p62 = scmp.ne.s32.totalorder %s47, %s61
    %p63 = scmp.eq.s32.totalorder %s16, 0
    %p64 = por %p62, %p63
    %s65 = ssub.s32 %s10, %s17
    %p66 = scmp.eq.s32.totalorder %s65, 0
    %s68 = sadd.s32 %s67, 1
    %s69 = scalar_select %p66, %s67, %s68
    %p72 = pneg %p66
    %p73 = scmp.eq.s32.totalorder %s10, 1
    %p74 = por %p72, %p73
    %p75 = scmp.ne.s32.totalorder %s67, %s70
    %p76 = scmp.eq.s32.totalorder %s10, 0
    %p77 = por %p75, %p76
    %p78 = scmp.ne.s32.totalorder %s67, %s70
    %p79 = scmp.eq.s32.totalorder %s15, 1
    %p80 = por %p78, %p79
    %p81 = scmp.ne.s32.totalorder %s70, %s71
    %p82 = scmp.eq.s32.totalorder %s15, 0
    %p83 = por %p81, %p82
    %p84 = scmp.ne.s32.totalorder %s70, %s71
    %p85 = scmp.eq.s32.totalorder %s16, 1
    %p86 = por %p84, %p85
    %p88 = scmp.ne.s32.totalorder %s71, %s87
    %p89 = scmp.eq.s32.totalorder %s16, 0
    %p90 = por %p88, %p89
    %s91 = ssub.s32 %s10, %s17
    %p92 = scmp.eq.s32.totalorder %s91, 0
    %s94 = sadd.s32 %s93, 1
    %s95 = scalar_select %p92, %s93, %s94
    %p98 = pneg %p92
    %p99 = scmp.eq.s32.totalorder %s10, 1
    %p100 = por %p98, %p99
    %p101 = scmp.ne.s32.totalorder %s93, %s96
    %p102 = scmp.eq.s32.totalorder %s10, 0
    %p103 = por %p101, %p102
    %p104 = scmp.ne.s32.totalorder %s93, %s96
    %p105 = scmp.eq.s32.totalorder %s15, 1
    %p106 = por %p104, %p105
    %p107 = scmp.ne.s32.totalorder %s96, %s97
    %p108 = scmp.eq.s32.totalorder %s15, 0
    %p109 = por %p107, %p108
    %p110 = scmp.ne.s32.totalorder %s96, %s97
    %p111 = scmp.eq.s32.totalorder %s16, 1
    %p112 = por %p110, %p111
    %p114 = scmp.ne.s32.totalorder %s97, %s113
    %p115 = scmp.eq.s32.totalorder %s16, 0
    %p116 = por %p114, %p115
    %p117 = scmp.le.s32.totalorder 1, %s10
    %p118 = scmp.lt.s32.totalorder %s10, 3
    %p119 = pnand %p117, %p118
    %p120 = pneg %p119
    // Predicated region
    $region9: #{tpu_custom_call.1} parent=5 // pred_check
      _
    $region10: #{tpu_custom_call.1} parent=5 // pred_check_branch
      %122 = sbr.rel (%p119) target = $region12
    $region11: #{tpu_custom_call.1} parent=5 // pred_region
      %s123 = ssub.s32 %s10, 1
      // Predicated region
      $region13: #{tpu_custom_call.1} parent=11 // pred_check
        %p124 = pneg %p57
      $region14: #{tpu_custom_call.1} parent=11 // pred_check_branch
        %126 = sbr.rel (%p124) target = $region16
      $region15: #{tpu_custom_call.1} parent=11 // pred_region
        _
      $region16: #{tpu_custom_call.1} parent=11 // pred_fallthru
        _
    $region12: #{tpu_custom_call.1} parent=5 // pred_fallthru
      _
    %p127 = scmp.lt.s32.totalorder %s10, 2
    // Predicated region
    $region17: #{tpu_custom_call.1} parent=5 // pred_check
      %p128 = pneg %p127
    $region18: #{tpu_custom_call.1} parent=5 // pred_check_branch
      %130 = sbr.rel (%p128) target = $region20
    $region19: #{tpu_custom_call.1} parent=5 // pred_region
      // Predicated region
      $region21: #{tpu_custom_call.1} parent=19 // pred_check
        %p131 = pneg %p30
      $region22: #{tpu_custom_call.1} parent=19 // pred_check_branch
        %133 = sbr.rel (%p131) target = $region24
      $region23: #{tpu_custom_call.1} parent=19 // pred_region
        %s134 = smul.u32 8, %s10
        %p135 = scmp.lt.s32.totalorder %s134, 15
        %s136 = scalar_select %p135, %s134, 15
        %s137 = smul.addr %s136, 8
        %s138 = scalar_lea.vmem %s0, %s137
        %s139 = smul.u32 8, %s10
      $region24: #{tpu_custom_call.1} parent=19 // pred_fallthru
        _
    $region20: #{tpu_custom_call.1} parent=5 // pred_fallthru
      _
    %p140 = scmp.le.s32.totalorder 1, %s10
    %p141 = scmp.lt.s32.totalorder %s10, 3
    %p142 = pnand %p140, %p141
    %p143 = pneg %p142
    // Predicated region
    $region25: #{tpu_custom_call.1} parent=5 // pred_check
      _
    $region26: #{tpu_custom_call.1} parent=5 // pred_check_branch
      %145 = sbr.rel (%p142) target = $region28
    $region27: #{tpu_custom_call.1} parent=5 // pred_region
      %s146 = ssub.s32 %s10, 1
      %s147 = smul.u32 8, %s15
      %p148 = scmp.lt.s32.totalorder %s147, 15
      %s149 = scalar_select %p148, %s147, 15
      %s150 = smul.addr %s149, 8
      %s151 = scalar_lea.vmem %s0, %s150
      %p152 = pneg %p36
      %p153 = pneg %p33
      %p154 = pneg %p57
      %p155 = pneg %p54
      %p156 = pneg %p83
      %p157 = pneg %p80
      %s158 = smul.u32 8, %s15
      %p159 = scmp.lt.s32.totalorder %s158, 15
      %s160 = scalar_select %p159, %s158, 15
      %s161 = smul.addr %s160, 8
      %s162 = scalar_lea.vmem %s2, %s161
      %p163 = pneg %p109
      %p164 = pneg %p106
      %s165 = smul.u32 8, %s15
      %p166 = scmp.lt.s32.totalorder %s165, 15
      %s167 = scalar_select %p166, %s165, 15
      %s168 = smul.addr %s167, 8
      %s169 = scalar_lea.vmem %s3, %s168
      %s170 = smul.u32 8, %s15
      %p171 = scmp.lt.s32.totalorder %s170, 15
      %s172 = scalar_select %p171, %s170, 15
      %s173 = smul.addr %s172, 8
      %s174 = scalar_lea.vmem %s0, %s173
      %s175 = smul.u32 8, %s15
      %s176 = smul.u32 8, %s15
      %p177 = scmp.lt.s32.totalorder %s176, 15
      %s178 = scalar_select %p177, %s176, 15
      %s179 = smul.addr %s178, 8
      %s180 = scalar_lea.vmem %s2, %s179
      %s181 = smul.u32 8, %s15
      %s182 = smul.u32 8, %s15
      %p183 = scmp.lt.s32.totalorder %s182, 15
      %s184 = scalar_select %p183, %s182, 15
      %s185 = smul.addr %s184, 8
      %s186 = scalar_lea.vmem %s3, %s185
      %s187 = smul.u32 8, %s15
      %v189 = vld [vmem:[%s174] sm:$0xff]
      %v190 = vld [vmem:[%s174 + $0x8] sm:$0xff]
      %v191 = vld [vmem:[%s174 + $0x10] sm:$0xff]
      %v192 = vld [vmem:[%s174 + $0x18] sm:$0xff]
      %v193 = vld [vmem:[%s174 + $0x20] sm:$0xff]
      %v194 = vld [vmem:[%s174 + $0x28] sm:$0xff]
      %v195 = vld [vmem:[%s174 + $0x30] sm:$0xff]
      %v196 = vld [vmem:[%s174 + $0x38] sm:$0xff]
      %vm197 = vcmask 31744
      %v198 = vsel %vm197, %v189, 0.0
      %v199 = vsel %vm197, %v190, 0.0
      %v200 = vsel %vm197, %v191, 0.0
      %v201 = vsel %vm197, %v192, 0.0
      %v202 = vsel %vm197, %v193, 0.0
      %v203 = vsel %vm197, %v194, 0.0
      %v204 = vsel %vm197, %v195, 0.0
      %v205 = vsel %vm197, %v196, 0.0
      %v206 = vpack.c.bf16 %v199, %v198
      %v207 = vpack.c.bf16 %v201, %v200
      %v208 = vpack.c.bf16 %v203, %v202
      %v209 = vpack.c.bf16 %v205, %v204
      %v210 = vld [vmem:[%s1] sm:$0xf]
      %v211 = vld [vmem:[%s1 + $0x4] sm:$0x1]
      %v212 = vunpack.c.l.bf16 %v211
      %v213 = vperm.slane %v212, 0
      %vm214 = vcmask 64512
      %v216 = vsel %vm214, %v206, 0
      %v219 = vsel %vm214, %v207, 0
      %v222 = vsel %vm214, %v208, 0
      %v225 = vsel %vm214, %v209, 0
      %vm227 = vcmask 1043456
      %v229 = vsel %vm227, %v210, 0
      %231 = vmatpush.bf16.msra.mxu0 0
      %232 = vmatpush.bf16.msra.mxu0 0
      %233 = vmatpush.bf16.msra.mxu0 0
      %234 = vmatpush.bf16.msra.mxu0 0
      %235 = vmatpush.bf16.msra.mxu0 0
      %236 = vmatpush.bf16.msra.mxu0 0
      %237 = vmatpush.bf16.msra.mxu0 0
      %238 = vmatpush.bf16.msra.mxu0 %v229
      %239 = vmatmul.bf16.gmra.mxu0 %v216
      %v240 = vpop.f32.mrf.mxu0
      %v241 = vadd.f32 %v213, %v240
      %v242 = vpop.f32.mrf.mxu0
      %v243 = vadd.f32 %v213, %v242
      %244 = vmatmul.bf16.gmra.mxu0 %v219
      %v245 = vpop.f32.mrf.mxu0
      %v246 = vadd.f32 %v213, %v245
      %v247 = vpop.f32.mrf.mxu0
      %v248 = vadd.f32 %v213, %v247
      %249 = vmatmul.bf16.gmra.mxu0 %v222
      %v250 = vpop.f32.mrf.mxu0
      %v251 = vadd.f32 %v213, %v250
      %v252 = vpop.f32.mrf.mxu0
      %v253 = vadd.f32 %v213, %v252
      %254 = vmatmul.bf16.gmra.mxu0 %v225
      %v255 = vpop.f32.mrf.mxu0
      %v256 = vadd.f32 %v213, %v255
      %v257 = vpop.f32.mrf.mxu0
      %v258 = vadd.f32 %v213, %v257
      %259 = vdwg.mxu0
      %v260 = vtanh.pop %v241
      %v261 = vtanh.pop %v243
      %v262 = vtanh.pop %v246
      %v263 = vtanh.pop %v248
      %v264 = vtanh.pop %v251
      %v265 = vtanh.pop %v253
      %v266 = vtanh.pop %v256
      %v267 = vtanh.pop %v258
      %v268 = vpack.c.bf16 %v261, %v260
      %v269 = vpack.c.bf16 %v263, %v262
      %v270 = vpack.c.bf16 %v265, %v264
      %v271 = vpack.c.bf16 %v267, %v266
      %v272 = vld [vmem:[%s1 + $0x8] sm:$0xf]
      %v273 = vld [vmem:[%s1 + $0xc] sm:$0xf]
      %v274 = vld [vmem:[%s1 + $0x10] sm:$0xf]
      %v275 = vld [vmem:[%s1 + $0x14] sm:$0xf]
      %v276 = vld [vmem:[%s1 + $0x18] sm:$0xf]
      %v277 = vld [vmem:[%s1 + $0x1c] sm:$0xf]
      %v278 = vld [vmem:[%s1 + $0x20] sm:$0xf]
      %v279 = vld [vmem:[%s1 + $0x24] sm:$0xf]
      %v280 = vld [vmem:[%s1 + $0x28] sm:$0xf]
      %v281 = vld [vmem:[%s1 + $0x2c] sm:$0xf]
      %v282 = vld [vmem:[%s1 + $0x30] sm:$0xf]
      %v283 = vld [vmem:[%s1 + $0x34] sm:$0xf]
      %v284 = vld [vmem:[%s1 + $0x38] sm:$0xf]
      %v285 = vld [vmem:[%s1 + $0x3c] sm:$0xf]
      %v286 = vld [vmem:[%s1 + $0x40] sm:$0xf]
      %v287 = vld [vmem:[%s1 + $0x44] sm:$0xf]
      %v288 = vld [vmem:[%s1 + $0x48] sm:$0x1]
      %v289 = vunpack.c.l.bf16 %v288
      %v290 = vperm.slane %v289, 0
      %v307 = vunpack.c.l.b16 %v272
      %v308 = vunpack.c.l.b16 %v273
      %v309 = vunpack.c.l.b16 %v274
      %v310 = vunpack.c.l.b16 %v275
      %v311 = vunpack.c.l.b16 %v276
      %v312 = vunpack.c.l.b16 %v277
      %v313 = vunpack.c.l.b16 %v278
      %v314 = vunpack.c.l.b16 %v279
      %v315 = vunpack.c.l.b16 %v280
      %v316 = vunpack.c.l.b16 %v281
      %v317 = vunpack.c.l.b16 %v282
      %v318 = vunpack.c.l.b16 %v283
      %v319 = vunpack.c.l.b16 %v284
      %v320 = vunpack.c.l.b16 %v285
      %v321 = vunpack.c.l.b16 %v286
      %v322 = vunpack.c.l.b16 %v287
      %v323 = vpack.c.b16 %v308, %v307
      %v324 = vpack.c.b16 %v310, %v309
      %v325 = vpack.c.b16 %v312, %v311
      %v326 = vpack.c.b16 %v314, %v313
      %v327 = vpack.c.b16 %v316, %v315
      %v328 = vpack.c.b16 %v318, %v317
      %v329 = vpack.c.b16 %v320, %v319
      %v330 = vpack.c.b16 %v322, %v321
      %339 = vmatpush.bf16.msra.mxu0 %v330
      %340 = vmatpush.bf16.msra.mxu0 %v329
      %341 = vmatpush.bf16.msra.mxu0 %v328
      %342 = vmatpush.bf16.msra.mxu0 %v327
      %343 = vmatpush.bf16.msra.mxu0 %v326
      %344 = vmatpush.bf16.msra.mxu0 %v325
      %345 = vmatpush.bf16.msra.mxu0 %v324
      %346 = vmatpush.bf16.msra.mxu0 %v323
      %347 = vmatmul.bf16.gmra.mxu0 %v268
      %v348 = vpop.f32.mrf.mxu0
      %v349 = vadd.f32 %v290, %v348
      %v350 = vpop.f32.mrf.mxu0
      %v351 = vadd.f32 %v290, %v350
      %352 = vmatmul.bf16.gmra.mxu0 %v269
      %v353 = vpop.f32.mrf.mxu0
      %v354 = vadd.f32 %v290, %v353
      %v355 = vpop.f32.mrf.mxu0
      %v356 = vadd.f32 %v290, %v355
      %357 = vmatmul.bf16.gmra.mxu0 %v270
      %v358 = vpop.f32.mrf.mxu0
      %v359 = vadd.f32 %v290, %v358
      %v360 = vpop.f32.mrf.mxu0
      %v361 = vadd.f32 %v290, %v360
      %362 = vmatmul.bf16.gmra.mxu0 %v271
      %v363 = vpop.f32.mrf.mxu0
      %v364 = vadd.f32 %v290, %v363
      %v365 = vpop.f32.mrf.mxu0
      %v366 = vadd.f32 %v290, %v365
      %367 = vdwg.mxu0
      %vm368 = vcmask 15360
      %369 = vst.msk [vmem:[%s180] sm:$0xff] %vm368, %v349
      %370 = vst.msk [vmem:[%s180 + $0x8] sm:$0xff] %vm368, %v351
      %371 = vst.msk [vmem:[%s180 + $0x10] sm:$0xff] %vm368, %v354
      %372 = vst.msk [vmem:[%s180 + $0x18] sm:$0xff] %vm368, %v356
      %373 = vst.msk [vmem:[%s180 + $0x20] sm:$0xff] %vm368, %v359
      %374 = vst.msk [vmem:[%s180 + $0x28] sm:$0xff] %vm368, %v361
      %375 = vst.msk [vmem:[%s180 + $0x30] sm:$0xff] %vm368, %v364
      %376 = vst.msk [vmem:[%s180 + $0x38] sm:$0xff] %vm368, %v366
      %v377 = vlaneseq
      %v378 = vand.u32 %v377, 127
      %vm379 = vcmp.lt.s32.totalorder %v378, 2
      %v380 = vsel %vm379, %v349, -inf
      %v381 = vsel %vm379, %v351, -inf
      %v382 = vsel %vm379, %v354, -inf
      %v383 = vsel %vm379, %v356, -inf
      %v384 = vsel %vm379, %v359, -inf
      %v385 = vsel %vm379, %v361, -inf
      %v386 = vsel %vm379, %v364, -inf
      %v387 = vsel %vm379, %v366, -inf
      %388 = vmax.xlane.f32.xlu0 %v380
      %v389 = vpop.xlane.xlu0 %388
      %390 = vmax.xlane.f32.xlu0 %v381
      %v391 = vpop.xlane.xlu0 %390
      %392 = vmax.xlane.f32.xlu0 %v382
      %v393 = vpop.xlane.xlu0 %392
      %394 = vmax.xlane.f32.xlu0 %v383
      %v395 = vpop.xlane.xlu0 %394
      %396 = vmax.xlane.f32.xlu0 %v384
      %v397 = vpop.xlane.xlu0 %396
      %398 = vmax.xlane.f32.xlu0 %v385
      %v399 = vpop.xlane.xlu0 %398
      %400 = vmax.xlane.f32.xlu0 %v386
      %v401 = vpop.xlane.xlu0 %400
      %402 = vmax.xlane.f32.xlu0 %v387
      %v403 = vpop.xlane.xlu0 %402
      %vm404 = vcmp.eq.f32.partialorder %v380, %v389
      %vm405 = vcmp.eq.f32.partialorder %v381, %v391
      %vm406 = vcmp.eq.f32.partialorder %v382, %v393
      %vm407 = vcmp.eq.f32.partialorder %v383, %v395
      %vm408 = vcmp.eq.f32.partialorder %v384, %v397
      %vm409 = vcmp.eq.f32.partialorder %v385, %v399
      %vm410 = vcmp.eq.f32.partialorder %v386, %v401
      %vm411 = vcmp.eq.f32.partialorder %v387, %v403
      %v412 = vsel %vm404, %v378, 128
      %v413 = vsel %vm405, %v378, 128
      %v414 = vsel %vm406, %v378, 128
      %v415 = vsel %vm407, %v378, 128
      %v416 = vsel %vm408, %v378, 128
      %v417 = vsel %vm409, %v378, 128
      %v418 = vsel %vm410, %v378, 128
      %v419 = vsel %vm411, %v378, 128
      %v420 = vand.u32 %v412, 65535
      %v421 = vshra.s32 %v412, 16
      %v422 = vcvt.s32.f32 %v420
      %v423 = vcvt.s32.f32 %v421
      %424 = vmin.xlane.f32.xlu0 %v423
      %v425 = vpop.xlane.xlu0 %424
      %vm426 = vcmp.eq.f32.partialorder %v423, %v425
      %v427 = vsel %vm426, %v422, inf
      %428 = vmin.xlane.f32.xlu0 %v427
      %v429 = vpop.xlane.xlu0 %428
      %v430 = vcvt.f32.s32 %v429
      %v431 = vcvt.f32.s32 %v425
      %v432 = vshll.u32 %v431, 16
      %v433 = vadd.s32 %v432, %v430
      %v434 = vand.u32 %v413, 65535
      %v435 = vshra.s32 %v413, 16
      %v436 = vcvt.s32.f32 %v434
      %v437 = vcvt.s32.f32 %v435
      %438 = vmin.xlane.f32.xlu0 %v437
      %v439 = vpop.xlane.xlu0 %438
      %vm440 = vcmp.eq.f32.partialorder %v437, %v439
      %v441 = vsel %vm440, %v436, inf
      %442 = vmin.xlane.f32.xlu0 %v441
      %v443 = vpop.xlane.xlu0 %442
      %v444 = vcvt.f32.s32 %v443
      %v445 = vcvt.f32.s32 %v439
      %v446 = vshll.u32 %v445, 16
      %v447 = vadd.s32 %v446, %v444
      %v448 = vand.u32 %v414, 65535
      %v449 = vshra.s32 %v414, 16
      %v450 = vcvt.s32.f32 %v448
      %v451 = vcvt.s32.f32 %v449
      %452 = vmin.xlane.f32.xlu0 %v451
      %v453 = vpop.xlane.xlu0 %452
      %vm454 = vcmp.eq.f32.partialorder %v451, %v453
      %v455 = vsel %vm454, %v450, inf
      %456 = vmin.xlane.f32.xlu0 %v455
      %v457 = vpop.xlane.xlu0 %456
      %v458 = vcvt.f32.s32 %v457
      %v459 = vcvt.f32.s32 %v453
      %v460 = vshll.u32 %v459, 16
      %v461 = vadd.s32 %v460, %v458
      %v462 = vand.u32 %v415, 65535
      %v463 = vshra.s32 %v415, 16
      %v464 = vcvt.s32.f32 %v462
      %v465 = vcvt.s32.f32 %v463
      %466 = vmin.xlane.f32.xlu0 %v465
      %v467 = vpop.xlane.xlu0 %466
      %vm468 = vcmp.eq.f32.partialorder %v465, %v467
      %v469 = vsel %vm468, %v464, inf
      %470 = vmin.xlane.f32.xlu0 %v469
      %v471 = vpop.xlane.xlu0 %470
      %v472 = vcvt.f32.s32 %v471
      %v473 = vcvt.f32.s32 %v467
      %v474 = vshll.u32 %v473, 16
      %v475 = vadd.s32 %v474, %v472
      %v476 = vand.u32 %v416, 65535
      %v477 = vshra.s32 %v416, 16
      %v478 = vcvt.s32.f32 %v476
      %v479 = vcvt.s32.f32 %v477
      %480 = vmin.xlane.f32.xlu0 %v479
      %v481 = vpop.xlane.xlu0 %480
      %vm482 = vcmp.eq.f32.partialorder %v479, %v481
      %v483 = vsel %vm482, %v478, inf
      %484 = vmin.xlane.f32.xlu0 %v483
      %v485 = vpop.xlane.xlu0 %484
      %v486 = vcvt.f32.s32 %v485
      %v487 = vcvt.f32.s32 %v481
      %v488 = vshll.u32 %v487, 16
      %v489 = vadd.s32 %v488, %v486
      %v490 = vand.u32 %v417, 65535
      %v491 = vshra.s32 %v417, 16
      %v492 = vcvt.s32.f32 %v490
      %v493 = vcvt.s32.f32 %v491
      %494 = vmin.xlane.f32.xlu0 %v493
      %v495 = vpop.xlane.xlu0 %494
      %vm496 = vcmp.eq.f32.partialorder %v493, %v495
      %v497 = vsel %vm496, %v492, inf
      %498 = vmin.xlane.f32.xlu0 %v497
      %v499 = vpop.xlane.xlu0 %498
      %v500 = vcvt.f32.s32 %v499
      %v501 = vcvt.f32.s32 %v495
      %v502 = vshll.u32 %v501, 16
      %v503 = vadd.s32 %v502, %v500
      %v504 = vand.u32 %v418, 65535
      %v505 = vshra.s32 %v418, 16
      %v506 = vcvt.s32.f32 %v504
      %v507 = vcvt.s32.f32 %v505
      %508 = vmin.xlane.f32.xlu0 %v507
      %v509 = vpop.xlane.xlu0 %508
      %vm510 = vcmp.eq.f32.partialorder %v507, %v509
      %v511 = vsel %vm510, %v506, inf
      %512 = vmin.xlane.f32.xlu0 %v511
      %v513 = vpop.xlane.xlu0 %512
      %v514 = vcvt.f32.s32 %v513
      %v515 = vcvt.f32.s32 %v509
      %v516 = vshll.u32 %v515, 16
      %v517 = vadd.s32 %v516, %v514
      %v518 = vand.u32 %v419, 65535
      %v519 = vshra.s32 %v419, 16
      %v520 = vcvt.s32.f32 %v518
      %v521 = vcvt.s32.f32 %v519
      %522 = vmin.xlane.f32.xlu0 %v521
      %v523 = vpop.xlane.xlu0 %522
      %vm524 = vcmp.eq.f32.partialorder %v521, %v523
      %v525 = vsel %vm524, %v520, inf
      %526 = vmin.xlane.f32.xlu0 %v525
      %v527 = vpop.xlane.xlu0 %526
      %v528 = vcvt.f32.s32 %v527
      %v529 = vcvt.f32.s32 %v523
      %v530 = vshll.u32 %v529, 16
      %v531 = vadd.s32 %v530, %v528
      %vm532 = vcmask 7168
      %533 = vst.msk [vmem:[%s186] sm:$0xff] %vm532, %v433
      %534 = vst.msk [vmem:[%s186 + $0x8] sm:$0xff] %vm532, %v447
      %535 = vst.msk [vmem:[%s186 + $0x10] sm:$0xff] %vm532, %v461
      %536 = vst.msk [vmem:[%s186 + $0x18] sm:$0xff] %vm532, %v475
      %537 = vst.msk [vmem:[%s186 + $0x20] sm:$0xff] %vm532, %v489
      %538 = vst.msk [vmem:[%s186 + $0x28] sm:$0xff] %vm532, %v503
      %539 = vst.msk [vmem:[%s186 + $0x30] sm:$0xff] %vm532, %v517
      %540 = vst.msk [vmem:[%s186 + $0x38] sm:$0xff] %vm532, %v531
      %s541 = smul.u32 8, %s15
      %p542 = scmp.lt.s32.totalorder %s541, 15
      %s543 = scalar_select %p542, %s541, 15
      %s544 = smul.addr %s543, 8
      %s545 = scalar_lea.vmem %s2, %s544
      %s546 = smul.u32 8, %s15
      %p547 = scmp.lt.s32.totalorder %s546, 15
      %s548 = scalar_select %p547, %s546, 15
      %s549 = smul.addr %s548, 8
      %s550 = scalar_lea.vmem %s3, %s549
      // Predicated region
      $region29: #{tpu_custom_call.1} parent=27 // pred_check
        %p551 = pneg %p80
      $region30: #{tpu_custom_call.1} parent=27 // pred_check_branch
        %553 = sbr.rel (%p551) target = $region32
      $region31: #{tpu_custom_call.1} parent=27 // pred_region
        %s554 = smul.u32 8, %s15
      $region32: #{tpu_custom_call.1} parent=27 // pred_fallthru
        _
      // Predicated region
      $region33: #{tpu_custom_call.1} parent=27 // pred_check
        %p555 = pneg %p106
      $region34: #{tpu_custom_call.1} parent=27 // pred_check_branch
        %557 = sbr.rel (%p555) target = $region36
      $region35: #{tpu_custom_call.1} parent=27 // pred_region
        %s558 = smul.u32 8, %s15
      $region36: #{tpu_custom_call.1} parent=27 // pred_fallthru
        _
    $region28: #{tpu_custom_call.1} parent=5 // pred_fallthru
      _
    %p559 = scmp.le.s32.totalorder 2, %s10
    // Predicated region
    $region37: #{tpu_custom_call.1} parent=5 // pred_check
      %p560 = pneg %p559
    $region38: #{tpu_custom_call.1} parent=5 // pred_check_branch
      %562 = sbr.rel (%p560) target = $region40
    $region39: #{tpu_custom_call.1} parent=5 // pred_region
      %s563 = ssub.s32 %s10, 2
      // Predicated region
      $region41: #{tpu_custom_call.1} parent=39 // pred_check
        %p564 = pneg %p86
      $region42: #{tpu_custom_call.1} parent=39 // pred_check_branch
        %566 = sbr.rel (%p564) target = $region44
      $region43: #{tpu_custom_call.1} parent=39 // pred_region
        %s567 = smul.u32 8, %s16
        %p568 = scmp.lt.s32.totalorder %s567, 15
        %s569 = scalar_select %p568, %s567, 15
        %s570 = smul.addr %s569, 8
        %s571 = scalar_lea.vmem %s2, %s570
      $region44: #{tpu_custom_call.1} parent=39 // pred_fallthru
        _
      // Predicated region
      $region45: #{tpu_custom_call.1} parent=39 // pred_check
        %p572 = pneg %p112
      $region46: #{tpu_custom_call.1} parent=39 // pred_check_branch
        %574 = sbr.rel (%p572) target = $region48
      $region47: #{tpu_custom_call.1} parent=39 // pred_region
        %s575 = smul.u32 8, %s16
        %p576 = scmp.lt.s32.totalorder %s575, 15
        %s577 = scalar_select %p576, %s575, 15
        %s578 = smul.addr %s577, 8
        %s579 = scalar_lea.vmem %s3, %s578
      $region48: #{tpu_custom_call.1} parent=39 // pred_fallthru
        _
    $region40: #{tpu_custom_call.1} parent=5 // pred_fallthru
      _
  $region6: #{tpu_custom_call.1} parent=0 // loop_footer
    %s14 = sadd.s32 1, %s10
  $region7: #{tpu_custom_call.1} parent=0 // loop_footer_branch
    %9 = sbr.rel target = $region3
  $region8: #{tpu_custom_call.1} parent=0 // loop_exit
    _

</llo_original>
